<compile_context>
chip_gen: v7x
topology: tpu7x:2x2x1
jax: 0.10.0
libtpu: 0.0.40
codegen_flags: <defaults>
</compile_context>

<pallas_src>
from functools import partial

import jax
import jax.numpy as jnp
from jax.experimental import pallas as pl
from jax.experimental.pallas import tpu as pltpu

LANES = 128      # vreg lane width
SUBLANES = 8     # vreg sublane count (fp32)


def _round_up(v, m):
    return ((v + m - 1) // m) * m


def _graph_classifier_kernel(offs, n_pad, g_pad, segments,
                             a_ref, x_ref, p_ref, o_ref):
    """Fused forward: 3x GCNConv -> per-graph max pool -> fc1 -> relu -> fc2.

    All parameter slices below are static, sublane-aligned, full-128-lane
    dense loads from the packed slab.
    """
    def W(name):                                   # [128, 128] weight tile
        off = offs[name]
        return p_ref[off:off + LANES, :]

    def Bn(name):                                  # [N_pad, 128] replicated bias
        off = offs[name]
        return p_ref[off:off + n_pad, :]

    def Bg(name):                                  # [G_pad, 128] replicated bias
        off = offs[name]
        return p_ref[off:off + g_pad, :]

    a = a_ref[...]                                 # [N_pad, N_pad] D^-1/2 (A+2I) D^-1/2
    x = x_ref[...]                                 # [N_pad, 128]  lane-padded features

    # GCNConv 1: relu(A_norm @ (X @ W1) + b1)
    h = jnp.dot(x, W("w1"), preferred_element_type=jnp.float32)
    h = jnp.dot(a, h, preferred_element_type=jnp.float32) + Bn("b1")
    h = jnp.maximum(h, 0.0)

    # GCNConv 2: relu(A_norm @ (H @ W2) + b2)
    h = jnp.dot(h, W("w2"), preferred_element_type=jnp.float32)
    h = jnp.dot(a, h, preferred_element_type=jnp.float32) + Bn("b2")
    h = jnp.maximum(h, 0.0)

    # GCNConv 3: A_norm @ (H @ W3) + b3   (no relu, as in Encoder.forward)
    h = jnp.dot(h, W("w3"), preferred_element_type=jnp.float32)
    h = jnp.dot(a, h, preferred_element_type=jnp.float32) + Bn("b3")

    # global_max_pool: nodes are contiguous per graph, so pool with static
    # per-graph row slices (O(N*H) peak instead of a [G, N, H] broadcast).
    rows = [jnp.max(h[s:s + c, :], axis=0, keepdims=True) for (s, c) in segments]
    if g_pad > len(segments):
        rows.append(jnp.zeros((g_pad - len(segments), LANES), jnp.float32))
    pooled = jnp.concatenate(rows, axis=0)         # [G_pad, 128]

    # MLP head: fc2(relu(fc1(pooled))).  Padded graph rows (>= G) carry
    # relu(bf1) @ wf2 + bf2 -- don't-care, sliced off in the wrapper.
    f = jnp.dot(pooled, W("wf1"), preferred_element_type=jnp.float32) + Bg("bf1")
    f = jnp.maximum(f, 0.0)
    o_ref[...] = jnp.dot(f, W("wf2"), preferred_element_type=jnp.float32) + Bg("bf2")


def _pack_params(params, n_pad, g_pad):
    """Pack all weights/biases into one [R, 128] fp32 slab + static row offsets.

    Weights are zero-padded to full [128, 128] tiles (contraction dim = 128 so
    the lane-padded activations dot straight through; zero rows/cols add 0).
    Biases are replicated to the row count they are added to (N_pad / G_pad)
    so the in-kernel add needs no broadcast and no partial-sublane load.
    """
    blocks, offs, off = [], {}, 0

    def add(name, block):
        nonlocal off
        blocks.append(block)
        offs[name] = off
        off += block.shape[0]

    for name in ("w1", "w2", "w3", "wf1", "wf2"):
        w = params[name].astype(jnp.float32)
        r, c = w.shape
        assert r <= LANES and c <= LANES, f"{name} {w.shape} exceeds 128x128 tile"
        add(name, jnp.zeros((LANES, LANES), jnp.float32).at[:r, :c].set(w))

    for name, rep in (("b1", n_pad), ("b2", n_pad), ("b3", n_pad),
                      ("bf1", g_pad), ("bf2", g_pad)):
        b = params[name].astype(jnp.float32).reshape(1, -1)
        c = b.shape[1]
        assert c <= LANES, f"{name} has {c} > 128 columns"
        row = jnp.zeros((1, LANES), jnp.float32).at[:, :c].set(b)
        add(name, jnp.tile(row, (rep, 1)))

    return jnp.concatenate(blocks, axis=0), offs


def graph_classifier_forward(a_norm, x, params, segments):
    """segments: tuple of (start_node, num_nodes) per graph (contiguous PyG batch)."""
    num_nodes, in_dim = x.shape
    out_dim = params["wf2"].shape[1]
    num_graphs = len(segments)
    assert in_dim <= LANES

    n_pad = _round_up(num_nodes, SUBLANES)
    g_pad = _round_up(num_graphs, SUBLANES)

    packed, offs = _pack_params(params, n_pad, g_pad)

    # Sublane-pad the node axis and lane-pad the feature axis (zeros).
    a_p = jnp.zeros((n_pad, n_pad), jnp.float32).at[:num_nodes, :num_nodes].set(
        a_norm.astype(jnp.float32))
    x_p = jnp.zeros((n_pad, LANES), jnp.float32).at[:num_nodes, :in_dim].set(
        x.astype(jnp.float32))

    flops = 2 * LANES * (3 * n_pad * LANES          # X@W1, H@W2, H@W3
                         + 3 * n_pad * n_pad        # three A_norm @ H
                         + 2 * g_pad * LANES)       # fc1, fc2
    bytes_accessed = 4 * (a_p.size + x_p.size + packed.size + g_pad * LANES)

    # No grid, no index_maps: every operand is a single full VMEM-resident block.
    out_padded = pl.pallas_call(
        partial(_graph_classifier_kernel, offs, n_pad, g_pad, tuple(segments)),
        out_shape=jax.ShapeDtypeStruct((g_pad, LANES), jnp.float32),
        in_specs=[pl.BlockSpec(memory_space=pltpu.MemorySpace.VMEM)] * 3,
        out_specs=pl.BlockSpec(memory_space=pltpu.MemorySpace.VMEM),
        compiler_params=pltpu.CompilerParams(has_side_effects=False),
        cost_estimate=pl.CostEstimate(flops=flops, transcendentals=0,
                                      bytes_accessed=bytes_accessed),
    )(a_p, x_p, packed)

    # Slice the lane/sublane padding back off outside the kernel.
    return out_padded[:num_graphs, :out_dim]


if __name__ == "__main__":
    INPUT_DIM, HID_DIM, OUTPUT_DIM = 8, 32, 4
    N = 16            # total nodes across the batch
    G = 2             # graphs in the batch
    nodes_per_g = N // G
    segments = tuple((g * nodes_per_g, nodes_per_g) for g in range(G))

    # deterministic undirected ring edges inside each graph
    src_list, dst_list = [], []
    for g in range(G):
        base = g * nodes_per_g
        for i in range(nodes_per_g):
            s = base + i
            d = base + (i + 1) % nodes_per_g
            src_list += [s, d]
            dst_list += [d, s]
    edge_index = jnp.array([src_list, dst_list], dtype=jnp.int32)   # [2, E]

    key = jax.random.PRNGKey(0)
    key, kx = jax.random.split(key)
    x = jax.random.normal(kx, (N, INPUT_DIM), dtype=jnp.float32)

    # ---- glue: dense improved-GCN normalization  D^{-1/2} (A + 2I) D^{-1/2} ----
    adj = jnp.zeros((N, N), jnp.float32)
    adj = adj.at[edge_index[1], edge_index[0]].set(1.0)   # [dst, src]
    adj = adj + 2.0 * jnp.eye(N, dtype=jnp.float32)       # improved=True self loops
    deg = adj.sum(axis=1)
    dinv = jnp.where(deg > 0, jax.lax.rsqrt(deg), 0.0)
    a_norm = dinv[:, None] * adj * dinv[None, :]

    # ---- deterministic parameter init (glorot weights, zero GCN biases) ----
    def glorot(k, shape):
        lim = (6.0 / (shape[0] + shape[1])) ** 0.5
        return jax.random.uniform(k, shape, jnp.float32, -lim, lim)

    keys = jax.random.split(jax.random.PRNGKey(0), 7)
    params = dict(
        w1=glorot(keys[0], (INPUT_DIM, HID_DIM)),
        b1=jnp.zeros((1, HID_DIM), jnp.float32),
        w2=glorot(keys[1], (HID_DIM, 2 * HID_DIM)),
        b2=jnp.zeros((1, 2 * HID_DIM), jnp.float32),
        w3=glorot(keys[2], (2 * HID_DIM, HID_DIM)),
        b3=jnp.zeros((1, HID_DIM), jnp.float32),
        wf1=glorot(keys[3], (HID_DIM, 2 * HID_DIM)),
        bf1=glorot(keys[4], (1, 2 * HID_DIM)),
        wf2=glorot(keys[5], (2 * HID_DIM, OUTPUT_DIM)),
        bf2=glorot(keys[6], (1, OUTPUT_DIM)),
    )

    out = graph_classifier_forward(a_norm, x, params, segments)
    out = jax.block_until_ready(out)

    # pure-JAX reference for a correctness sanity check
    def ref():
        h = jnp.maximum(a_norm @ (x @ params["w1"]) + params["b1"], 0.0)
        h = jnp.maximum(a_norm @ (h @ params["w2"]) + params["b2"], 0.0)
        h = a_norm @ (h @ params["w3"]) + params["b3"]
        pooled = jnp.stack([jnp.max(h[s:s + c, :], axis=0) for (s, c) in segments],
                           axis=0)
        f = jnp.maximum(pooled @ params["wf1"] + params["bf1"], 0.0)
        return f @ params["wf2"] + params["bf2"]

    assert out.shape == (G, OUTPUT_DIM)
    assert jnp.allclose(out, ref(), atol=1e-4, rtol=1e-4)
    print("KERNEL_OK")
</pallas_src>

<mosaic_0001>
module attributes {stable_mosaic.version = 11 : i64} {
  func.func @_graph_classifier_kernel(%arg0: memref<16x16xf32, #tpu.memory_space<vmem>>, %arg1: memref<16x128xf32, #tpu.memory_space<vmem>>, %arg2: memref<704x128xf32, #tpu.memory_space<vmem>>, %arg3: memref<8x128xf32, #tpu.memory_space<vmem>>) attributes {dimension_semantics = [], scalar_prefetch = 0 : i64, scratch_operands = 0 : i64, tpu.core_type = #tpu.core_type<tc>} {
    %c0 = arith.constant 0 : index
    %c0_0 = arith.constant 0 : index
    %0 = vector.load %arg0[%c0, %c0_0] : memref<16x16xf32, #tpu.memory_space<vmem>>, vector<16x16xf32>
    %c0_1 = arith.constant 0 : index
    %c0_2 = arith.constant 0 : index
    %1 = vector.load %arg1[%c0_1, %c0_2] : memref<16x128xf32, #tpu.memory_space<vmem>>, vector<16x128xf32>
    %c0_3 = arith.constant 0 : index
    %c0_4 = arith.constant 0 : index
    %2 = vector.load %arg2[%c0_3, %c0_4] : memref<704x128xf32, #tpu.memory_space<vmem>>, vector<128x128xf32>
    %cst = arith.constant dense<0.000000e+00> : vector<16x128xf32>
    %3 = tpu.matmul %1, %2, %cst {dimension_numbers = #tpu.dot_dimension_numbers<[1], [0], [0], [1], [0, 0, 1, 1], [], []>} : vector<16x128xf32>, vector<128x128xf32>, vector<16x128xf32> -> vector<16x128xf32>
    %cst_5 = arith.constant dense<0.000000e+00> : vector<16x128xf32>
    %4 = tpu.matmul %0, %3, %cst_5 {dimension_numbers = #tpu.dot_dimension_numbers<[1], [0], [0], [1], [0, 0, 1, 1], [], []>} : vector<16x16xf32>, vector<16x128xf32>, vector<16x128xf32> -> vector<16x128xf32>
    %c640 = arith.constant 640 : index
    %c0_6 = arith.constant 0 : index
    %5 = vector.load %arg2[%c640, %c0_6] : memref<704x128xf32, #tpu.memory_space<vmem>>, vector<16x128xf32>
    %6 = arith.addf %4, %5 : vector<16x128xf32>
    %cst_7 = arith.constant 0.000000e+00 : f32
    %7 = vector.broadcast %cst_7 : f32 to vector<16x128xf32>
    %8 = arith.maximumf %6, %7 : vector<16x128xf32>
    %c128 = arith.constant 128 : index
    %c0_8 = arith.constant 0 : index
    %9 = vector.load %arg2[%c128, %c0_8] : memref<704x128xf32, #tpu.memory_space<vmem>>, vector<128x128xf32>
    %cst_9 = arith.constant dense<0.000000e+00> : vector<16x128xf32>
    %10 = tpu.matmul %8, %9, %cst_9 {dimension_numbers = #tpu.dot_dimension_numbers<[1], [0], [0], [1], [0, 0, 1, 1], [], []>} : vector<16x128xf32>, vector<128x128xf32>, vector<16x128xf32> -> vector<16x128xf32>
    %cst_10 = arith.constant dense<0.000000e+00> : vector<16x128xf32>
    %11 = tpu.matmul %0, %10, %cst_10 {dimension_numbers = #tpu.dot_dimension_numbers<[1], [0], [0], [1], [0, 0, 1, 1], [], []>} : vector<16x16xf32>, vector<16x128xf32>, vector<16x128xf32> -> vector<16x128xf32>
    %c656 = arith.constant 656 : index
    %c0_11 = arith.constant 0 : index
    %12 = vector.load %arg2[%c656, %c0_11] : memref<704x128xf32, #tpu.memory_space<vmem>>, vector<16x128xf32>
    %13 = arith.addf %11, %12 : vector<16x128xf32>
    %cst_12 = arith.constant 0.000000e+00 : f32
    %14 = vector.broadcast %cst_12 : f32 to vector<16x128xf32>
    %15 = arith.maximumf %13, %14 : vector<16x128xf32>
    %c256 = arith.constant 256 : index
    %c0_13 = arith.constant 0 : index
    %16 = vector.load %arg2[%c256, %c0_13] : memref<704x128xf32, #tpu.memory_space<vmem>>, vector<128x128xf32>
    %cst_14 = arith.constant dense<0.000000e+00> : vector<16x128xf32>
    %17 = tpu.matmul %15, %16, %cst_14 {dimension_numbers = #tpu.dot_dimension_numbers<[1], [0], [0], [1], [0, 0, 1, 1], [], []>} : vector<16x128xf32>, vector<128x128xf32>, vector<16x128xf32> -> vector<16x128xf32>
    %cst_15 = arith.constant dense<0.000000e+00> : vector<16x128xf32>
    %18 = tpu.matmul %0, %17, %cst_15 {dimension_numbers = #tpu.dot_dimension_numbers<[1], [0], [0], [1], [0, 0, 1, 1], [], []>} : vector<16x16xf32>, vector<16x128xf32>, vector<16x128xf32> -> vector<16x128xf32>
    %c672 = arith.constant 672 : index
    %c0_16 = arith.constant 0 : index
    %19 = vector.load %arg2[%c672, %c0_16] : memref<704x128xf32, #tpu.memory_space<vmem>>, vector<16x128xf32>
    %20 = arith.addf %18, %19 : vector<16x128xf32>
    %21 = vector.extract_strided_slice %20 {offsets = [0, 0], sizes = [8, 128], strides = [1, 1]} : vector<16x128xf32> to vector<8x128xf32>
    %cst_17 = arith.constant dense<0xFF800000> : vector<128xf32>
    %22 = vector.multi_reduction <maximumf>, %21, %cst_17 [0] : vector<8x128xf32> to vector<128xf32>
    %23 = vector.shape_cast %22 : vector<128xf32> to vector<1x128xf32>
    %24 = vector.extract_strided_slice %20 {offsets = [8, 0], sizes = [8, 128], strides = [1, 1]} : vector<16x128xf32> to vector<8x128xf32>
    %cst_18 = arith.constant dense<0xFF800000> : vector<128xf32>
    %25 = vector.multi_reduction <maximumf>, %24, %cst_18 [0] : vector<8x128xf32> to vector<128xf32>
    %26 = vector.shape_cast %25 : vector<128xf32> to vector<1x128xf32>
    %cst_19 = arith.constant 0.000000e+00 : f32
    %27 = vector.broadcast %cst_19 : f32 to vector<6x128xf32>
    %28 = tpu.concatenate %23, %26, %27 in 0 : vector<1x128xf32>, vector<1x128xf32>, vector<6x128xf32> -> vector<8x128xf32>
    %c384 = arith.constant 384 : index
    %c0_20 = arith.constant 0 : index
    %29 = vector.load %arg2[%c384, %c0_20] : memref<704x128xf32, #tpu.memory_space<vmem>>, vector<128x128xf32>
    %cst_21 = arith.constant dense<0.000000e+00> : vector<8x128xf32>
    %30 = tpu.matmul %28, %29, %cst_21 {dimension_numbers = #tpu.dot_dimension_numbers<[1], [0], [0], [1], [0, 0, 1, 1], [], []>} : vector<8x128xf32>, vector<128x128xf32>, vector<8x128xf32> -> vector<8x128xf32>
    %c688 = arith.constant 688 : index
    %c0_22 = arith.constant 0 : index
    %31 = vector.load %arg2[%c688, %c0_22] : memref<704x128xf32, #tpu.memory_space<vmem>>, vector<8x128xf32>
    %32 = arith.addf %30, %31 : vector<8x128xf32>
    %cst_23 = arith.constant 0.000000e+00 : f32
    %33 = vector.broadcast %cst_23 : f32 to vector<8x128xf32>
    %34 = arith.maximumf %32, %33 : vector<8x128xf32>
    %c512 = arith.constant 512 : index
    %c0_24 = arith.constant 0 : index
    %35 = vector.load %arg2[%c512, %c0_24] : memref<704x128xf32, #tpu.memory_space<vmem>>, vector<128x128xf32>
    %cst_25 = arith.constant dense<0.000000e+00> : vector<8x128xf32>
    %36 = tpu.matmul %34, %35, %cst_25 {dimension_numbers = #tpu.dot_dimension_numbers<[1], [0], [0], [1], [0, 0, 1, 1], [], []>} : vector<8x128xf32>, vector<128x128xf32>, vector<8x128xf32> -> vector<8x128xf32>
    %c696 = arith.constant 696 : index
    %c0_26 = arith.constant 0 : index
    %37 = vector.load %arg2[%c696, %c0_26] : memref<704x128xf32, #tpu.memory_space<vmem>>, vector<8x128xf32>
    %38 = arith.addf %36, %37 : vector<8x128xf32>
    %c0_27 = arith.constant 0 : index
    %c0_28 = arith.constant 0 : index
    %39 = vector.load %arg3[%c0_27, %c0_28] : memref<8x128xf32, #tpu.memory_space<vmem>>, vector<8x128xf32>
    tpu.vector_store %arg3[%c0_27, %c0_28], %38 {strides = array<i32>} : memref<8x128xf32, #tpu.memory_space<vmem>>, vector<8x128xf32>,
    return
  }
}

</mosaic_0001>

<llo_original>
// kernel: tpu_custom_call.1
$region0: #{tpu_custom_call.1}
  #allocation0 [shape = 'u32[]', space=smem, size = 0x4, offset = 0x4, fixed_abs, tag = 'smem constant byte address 0x4 - core index']
  #allocation1 [shape = 'u32[144,128]{1,0:T(1,128)}', space=vmem, size = 0x12000, scoped, tag = 'internal scratch']
  %s0 = inlined_call_operand.hbm [shape: f32[16,16], index: 0, kind: input, shape index: {}]
  %s1 = inlined_call_operand.hbm [shape: f32[16,128], index: 1, kind: input, shape index: {}]
  %s2 = inlined_call_operand.hbm [shape: f32[704,128], index: 2, kind: input, shape index: {}]
  %s3 = inlined_call_operand.hbm [shape: f32[8,128], index: 3, kind: output, shape index: {}]
  %s4 = sld [smem:[#allocation0]]
  $region34: #{tpu_custom_call.1} parent=0
    _
  %s6 = ssub.s32 1, %s4
  %s7 = scalar_select 0, %s6, %s4
  $region1: #{tpu_custom_call.1} parent=0
    #allocation2 [shape = 'u8[8192]{0}', space=vmem, size = 0x2000, scoped, tag = 'input window, operand 0, single buffered']
    #allocation3 [shape = 's32[1]{0}', space=sflag, size = 0x4, scoped, tag = 'scoped memory for tpu_custom_call.1']
    #allocation4 [shape = 's32[1]{0}', space=sflag, size = 0x4, scoped, tag = 'scoped memory for tpu_custom_call.1']
    #allocation5 [shape = 'u8[8192]{0}', space=vmem, size = 0x2000, scoped, tag = 'input window, operand 1, single buffered']
    #allocation6 [shape = 's32[1]{0}', space=sflag, size = 0x4, scoped, tag = 'scoped memory for tpu_custom_call.1']
    #allocation7 [shape = 'u8[360448]{0}', space=vmem, size = 0x58000, scoped, tag = 'input window, operand 2, single buffered']
    #allocation8 [shape = 'u8[4096]{0}', space=vmem, size = 0x1000, scoped, tag = 'output window, operand 0, single buffered']
    %8 = vsyncpa [#allocation3], 0
    %9 = vsyncpa [#allocation6], 0
    %10 = vsyncpa [#allocation4], 0
    // Predicated region
    $region2: #{tpu_custom_call.1} parent=1 // pred_check
      _
    $region3: #{tpu_custom_call.1} parent=1 // pred_check_branch
      %12 = sbr.rel (0) target = $region5
    $region4: #{tpu_custom_call.1} parent=1 // pred_region
      %s14 = ssub.s32 256, 256
      %15 = vsyncadd [#allocation3], %s14
      %s16 = sshll.u32 [#allocation2], 4
      %s17 = int_to_ptr.vmem [resolvable:$true] %s16
      %22 = dma.hbm_to_vmem [thread:$0]  %s0, 256, %s17, [#allocation3], 128, 128, 8
    $region5: #{tpu_custom_call.1} parent=1 // pred_fallthru
      _
    // Predicated region
    $region6: #{tpu_custom_call.1} parent=1 // pred_check
      _
    $region7: #{tpu_custom_call.1} parent=1 // pred_check_branch
      %24 = sbr.rel (0) target = $region9
    $region8: #{tpu_custom_call.1} parent=1 // pred_region
      %s26 = ssub.s32 256, 256
      %27 = vsyncadd [#allocation6], %s26
      %s28 = sshll.u32 [#allocation5], 4
      %s29 = int_to_ptr.vmem [resolvable:$true] %s28
      %34 = dma.hbm_to_vmem [thread:$0]  %s1, 256, %s29, [#allocation6], 128, 128, 8
    $region9: #{tpu_custom_call.1} parent=1 // pred_fallthru
      _
    // Predicated region
    $region10: #{tpu_custom_call.1} parent=1 // pred_check
      _
    $region11: #{tpu_custom_call.1} parent=1 // pred_check_branch
      %36 = sbr.rel (0) target = $region13
    $region12: #{tpu_custom_call.1} parent=1 // pred_region
      %s38 = ssub.s32 11264, 11264
      %39 = vsyncadd [#allocation6], %s38
      %s40 = sshll.u32 [#allocation7], 4
      %s41 = int_to_ptr.vmem [resolvable:$true] %s40
      %46 = dma.hbm_to_vmem [thread:$0]  %s2, 11264, %s41, [#allocation6], 128, 128, 8
    $region13: #{tpu_custom_call.1} parent=1 // pred_fallthru
      _
    // Predicated region
    $region14: #{tpu_custom_call.1} parent=1 // pred_check
      _
    $region15: #{tpu_custom_call.1} parent=1 // pred_check_branch
      %48 = sbr.rel (0) target = $region17
    $region16: #{tpu_custom_call.1} parent=1 // pred_region
      %49 = dma.done [#allocation3], 256
    $region17: #{tpu_custom_call.1} parent=1 // pred_fallthru
      _
    // Predicated region
    $region18: #{tpu_custom_call.1} parent=1 // pred_check
      _
    $region19: #{tpu_custom_call.1} parent=1 // pred_check_branch
      %51 = sbr.rel (0) target = $region21
    $region20: #{tpu_custom_call.1} parent=1 // pred_region
      %52 = dma.done [#allocation6], 256
    $region21: #{tpu_custom_call.1} parent=1 // pred_fallthru
      _
    // Predicated region
    $region22: #{tpu_custom_call.1} parent=1 // pred_check
      _
    $region23: #{tpu_custom_call.1} parent=1 // pred_check_branch
      %54 = sbr.rel (0) target = $region25
    $region24: #{tpu_custom_call.1} parent=1 // pred_region
      %55 = dma.done [#allocation6], 11264
    $region25: #{tpu_custom_call.1} parent=1 // pred_fallthru
      _
    %v56 = vld [vmem:[#allocation2] sm:$0xff]
    %v57 = vld [vmem:[#allocation2 + $0x8] sm:$0xff]
    %v58 = vld [vmem:[#allocation5] sm:$0xff]
    %v59 = vld [vmem:[#allocation5 + $0x8] sm:$0xff]
    %v60 = vld [vmem:[#allocation7] sm:$0xff]
    %v61 = vld [vmem:[#allocation7 + $0x8] sm:$0xff]
    %v62 = vld [vmem:[#allocation7 + $0x10] sm:$0xff]
    %v63 = vld [vmem:[#allocation7 + $0x18] sm:$0xff]
    %v64 = vld [vmem:[#allocation7 + $0x20] sm:$0xff]
    %v65 = vld [vmem:[#allocation7 + $0x28] sm:$0xff]
    %v66 = vld [vmem:[#allocation7 + $0x30] sm:$0xff]
    %v67 = vld [vmem:[#allocation7 + $0x38] sm:$0xff]
    %v68 = vld [vmem:[#allocation7 + $0x40] sm:$0xff]
    %v69 = vld [vmem:[#allocation7 + $0x48] sm:$0xff]
    %v70 = vld [vmem:[#allocation7 + $0x50] sm:$0xff]
    %v71 = vld [vmem:[#allocation7 + $0x58] sm:$0xff]
    %v72 = vld [vmem:[#allocation7 + $0x60] sm:$0xff]
    %v73 = vld [vmem:[#allocation7 + $0x68] sm:$0xff]
    %v74 = vld [vmem:[#allocation7 + $0x70] sm:$0xff]
    %v75 = vld [vmem:[#allocation7 + $0x78] sm:$0xff]
    %76 = vmatprep.subr.mxu0 0.0
    %77 = vmatpush1.msra.mxu0 %v60
    %78 = vmatprep.subr.mxu0 0.0
    %79 = vmatpush1.msra.mxu0 %v61
    %80 = vmatprep.subr.mxu0 0.0
    %81 = vmatpush1.msra.mxu0 %v62
    %82 = vmatprep.subr.mxu0 0.0
    %83 = vmatpush1.msra.mxu0 %v63
    %84 = vmatprep.subr.mxu0 0.0
    %85 = vmatpush1.msra.mxu0 %v64
    %86 = vmatprep.subr.mxu0 0.0
    %87 = vmatpush1.msra.mxu0 %v65
    %88 = vmatprep.subr.mxu0 0.0
    %89 = vmatpush1.msra.mxu0 %v66
    %90 = vmatprep.subr.mxu0 0.0
    %91 = vmatpush1.msra.mxu0 %v67
    %92 = vmatprep.subr.mxu0 0.0
    %93 = vmatpush1.msra.mxu0 %v68
    %94 = vmatprep.subr.mxu0 0.0
    %95 = vmatpush1.msra.mxu0 %v69
    %96 = vmatprep.subr.mxu0 0.0
    %97 = vmatpush1.msra.mxu0 %v70
    %98 = vmatprep.subr.mxu0 0.0
    %99 = vmatpush1.msra.mxu0 %v71
    %100 = vmatprep.subr.mxu0 0.0
    %101 = vmatpush1.msra.mxu0 %v72
    %102 = vmatprep.subr.mxu0 0.0
    %103 = vmatpush1.msra.mxu0 %v73
    %104 = vmatprep.subr.mxu0 0.0
    %105 = vmatpush1.msra.mxu0 %v74
    %106 = vmatprep.subr.mxu0 0.0
    %107 = vmatpush1.msra.mxu0 %v75
    %108 = vmatprep.subr.mxu0 0.0
    %109 = vmatpush1.msra.mxu0 0.0
    %110 = vmatprep.subr.mxu0 0.0
    %111 = vmatpush1.msra.mxu0 0.0
    %112 = vmatprep.subr.mxu0 0.0
    %113 = vmatpush1.msra.mxu0 0.0
    %114 = vmatprep.subr.mxu0 0.0
    %115 = vmatpush1.msra.mxu0 0.0
    %116 = vmatprep.subr.mxu0 0.0
    %117 = vmatpush1.msra.mxu0 0.0
    %118 = vmatprep.subr.mxu0 0.0
    %119 = vmatpush1.msra.mxu0 0.0
    %120 = vmatprep.subr.mxu0 0.0
    %121 = vmatpush1.msra.mxu0 0.0
    %122 = vmatprep.subr.mxu0 0.0
    %123 = vmatpush1.msra.mxu0 0.0
    %124 = vmatprep.subr.mxu0 0.0
    %125 = vmatpush1.msra.mxu0 0.0
    %126 = vmatprep.subr.mxu0 0.0
    %127 = vmatpush1.msra.mxu0 0.0
    %128 = vmatprep.subr.mxu0 0.0
    %129 = vmatpush1.msra.mxu0 0.0
    %130 = vmatprep.subr.mxu0 0.0
    %131 = vmatpush1.msra.mxu0 0.0
    %132 = vmatprep.subr.mxu0 0.0
    %133 = vmatpush1.msra.mxu0 0.0
    %134 = vmatprep.subr.mxu0 0.0
    %135 = vmatpush1.msra.mxu0 0.0
    %136 = vmatprep.subr.mxu0 0.0
    %137 = vmatpush1.msra.mxu0 0.0
    %138 = vmatprep.subr.mxu0 0.0
    %139 = vmatpush1.msra.mxu0 0.0
    %140 = vmatprep.mubr.f32.mxu0 0.0
    %141 = vmatmul.mubr.f32.gmra.mrb[0].mxu0 %v58
    %v142 = vpop.f32.mrb[0].mxu0
    %v143 = vadd.f32 0.0, %v142
    %v144 = vpop.f32.mrb[0].mxu0
    %145 = vmatprep.mubr.f32.mxu0 0.0
    %146 = vmatmul.mubr.f32.gmra.mrb[0].mxu0 %v59
    %v147 = vpop.f32.mrb[0].mxu0
    %v148 = vadd.f32 0.0, %v147
    %v149 = vpop.f32.mrb[0].mxu0
    %150 = vdwg.mxu0
    %v151 = vld [vmem:[#allocation7 + $0x280] sm:$0xff]
    %v152 = vld [vmem:[#allocation7 + $0x288] sm:$0xff]
    %vm153 = vcmask 130048
    %v155 = vsel %vm153, %v56, 0
    %v158 = vsel %vm153, %v57, 0
    %160 = vmatprep.subr.mxu0 0.0
    %161 = vmatpush1.msra.mxu0 %v143
    %162 = vmatprep.subr.mxu0 0.0
    %163 = vmatpush1.msra.mxu0 %v148
    %164 = vmatprep.subr.mxu0 0.0
    %165 = vmatpush1.msra.mxu0 0.0
    %166 = vmatprep.subr.mxu0 0.0
    %167 = vmatpush1.msra.mxu0 0.0
    %168 = vmatprep.subr.mxu0 0.0
    %169 = vmatpush1.msra.mxu0 0.0
    %170 = vmatprep.subr.mxu0 0.0
    %171 = vmatpush1.msra.mxu0 0.0
    %172 = vmatprep.subr.mxu0 0.0
    %173 = vmatpush1.msra.mxu0 0.0
    %174 = vmatprep.subr.mxu0 0.0
    %175 = vmatpush1.msra.mxu0 0.0
    %176 = vmatprep.subr.mxu0 0.0
    %177 = vmatpush1.msra.mxu0 0.0
    %178 = vmatprep.subr.mxu0 0.0
    %179 = vmatpush1.msra.mxu0 0.0
    %180 = vmatprep.subr.mxu0 0.0
    %181 = vmatpush1.msra.mxu0 0.0
    %182 = vmatprep.subr.mxu0 0.0
    %183 = vmatpush1.msra.mxu0 0.0
    %184 = vmatprep.subr.mxu0 0.0
    %185 = vmatpush1.msra.mxu0 0.0
    %186 = vmatprep.subr.mxu0 0.0
    %187 = vmatpush1.msra.mxu0 0.0
    %188 = vmatprep.subr.mxu0 0.0
    %189 = vmatpush1.msra.mxu0 0.0
    %190 = vmatprep.subr.mxu0 0.0
    %191 = vmatpush1.msra.mxu0 0.0
    %192 = vmatprep.subr.mxu0 0.0
    %193 = vmatpush1.msra.mxu0 0.0
    %194 = vmatprep.subr.mxu0 0.0
    %195 = vmatpush1.msra.mxu0 0.0
    %196 = vmatprep.subr.mxu0 0.0
    %197 = vmatpush1.msra.mxu0 0.0
    %198 = vmatprep.subr.mxu0 0.0
    %199 = vmatpush1.msra.mxu0 0.0
    %200 = vmatprep.subr.mxu0 0.0
    %201 = vmatpush1.msra.mxu0 0.0
    %202 = vmatprep.subr.mxu0 0.0
    %203 = vmatpush1.msra.mxu0 0.0
    %204 = vmatprep.subr.mxu0 0.0
    %205 = vmatpush1.msra.mxu0 0.0
    %206 = vmatprep.subr.mxu0 0.0
    %207 = vmatpush1.msra.mxu0 0.0
    %208 = vmatprep.subr.mxu0 0.0
    %209 = vmatpush1.msra.mxu0 0.0
    %210 = vmatprep.subr.mxu0 0.0
    %211 = vmatpush1.msra.mxu0 0.0
    %212 = vmatprep.subr.mxu0 0.0
    %213 = vmatpush1.msra.mxu0 0.0
    %214 = vmatprep.subr.mxu0 0.0
    %215 = vmatpush1.msra.mxu0 0.0
    %216 = vmatprep.subr.mxu0 0.0
    %217 = vmatpush1.msra.mxu0 0.0
    %218 = vmatprep.subr.mxu0 0.0
    %219 = vmatpush1.msra.mxu0 0.0
    %220 = vmatprep.subr.mxu0 0.0
    %221 = vmatpush1.msra.mxu0 0.0
    %222 = vmatprep.subr.mxu0 0.0
    %223 = vmatpush1.msra.mxu0 0.0
    %224 = vmatprep.mubr.f32.mxu0 0.0
    %225 = vmatmul.mubr.f32.gmra.mrb[0].mxu0 %v155
    %v226 = vpop.f32.mrb[0].mxu0
    %v227 = vadd.f32 %v151, %v226
    %v228 = vpop.f32.mrb[0].mxu0
    %229 = vmatprep.mubr.f32.mxu0 0.0
    %230 = vmatmul.mubr.f32.gmra.mrb[0].mxu0 %v158
    %v231 = vpop.f32.mrb[0].mxu0
    %v232 = vadd.f32 %v152, %v231
    %v233 = vpop.f32.mrb[0].mxu0
    %234 = vdwg.mxu0
    %v235 = vmax.f32 %v227, 0.0
    %v236 = vmax.f32 %v232, 0.0
    %v237 = vld [vmem:[#allocation7 + $0x80] sm:$0xff]
    %v238 = vld [vmem:[#allocation7 + $0x88] sm:$0xff]
    %v239 = vld [vmem:[#allocation7 + $0x90] sm:$0xff]
    %v240 = vld [vmem:[#allocation7 + $0x98] sm:$0xff]
    %v241 = vld [vmem:[#allocation7 + $0xa0] sm:$0xff]
    %v242 = vld [vmem:[#allocation7 + $0xa8] sm:$0xff]
    %v243 = vld [vmem:[#allocation7 + $0xb0] sm:$0xff]
    %v244 = vld [vmem:[#allocation7 + $0xb8] sm:$0xff]
    %v245 = vld [vmem:[#allocation7 + $0xc0] sm:$0xff]
    %v246 = vld [vmem:[#allocation7 + $0xc8] sm:$0xff]
    %v247 = vld [vmem:[#allocation7 + $0xd0] sm:$0xff]
    %v248 = vld [vmem:[#allocation7 + $0xd8] sm:$0xff]
    %v249 = vld [vmem:[#allocation7 + $0xe0] sm:$0xff]
    %v250 = vld [vmem:[#allocation7 + $0xe8] sm:$0xff]
    %v251 = vld [vmem:[#allocation7 + $0xf0] sm:$0xff]
    %v252 = vld [vmem:[#allocation7 + $0xf8] sm:$0xff]
    %253 = vmatprep.subr.mxu0 0.0
    %254 = vmatpush1.msra.mxu0 %v237
    %255 = vmatprep.subr.mxu0 0.0
    %256 = vmatpush1.msra.mxu0 %v238
    %257 = vmatprep.subr.mxu0 0.0
    %258 = vmatpush1.msra.mxu0 %v239
    %259 = vmatprep.subr.mxu0 0.0
    %260 = vmatpush1.msra.mxu0 %v240
    %261 = vmatprep.subr.mxu0 0.0
    %262 = vmatpush1.msra.mxu0 %v241
    %263 = vmatprep.subr.mxu0 0.0
    %264 = vmatpush1.msra.mxu0 %v242
    %265 = vmatprep.subr.mxu0 0.0
    %266 = vmatpush1.msra.mxu0 %v243
    %267 = vmatprep.subr.mxu0 0.0
    %268 = vmatpush1.msra.mxu0 %v244
    %269 = vmatprep.subr.mxu0 0.0
    %270 = vmatpush1.msra.mxu0 %v245
    %271 = vmatprep.subr.mxu0 0.0
    %272 = vmatpush1.msra.mxu0 %v246
    %273 = vmatprep.subr.mxu0 0.0
    %274 = vmatpush1.msra.mxu0 %v247
    %275 = vmatprep.subr.mxu0 0.0
    %276 = vmatpush1.msra.mxu0 %v248
    %277 = vmatprep.subr.mxu0 0.0
    %278 = vmatpush1.msra.mxu0 %v249
    %279 = vmatprep.subr.mxu0 0.0
    %280 = vmatpush1.msra.mxu0 %v250
    %281 = vmatprep.subr.mxu0 0.0
    %282 = vmatpush1.msra.mxu0 %v251
    %283 = vmatprep.subr.mxu0 0.0
    %284 = vmatpush1.msra.mxu0 %v252
    %285 = vmatprep.subr.mxu0 0.0
    %286 = vmatpush1.msra.mxu0 0.0
    %287 = vmatprep.subr.mxu0 0.0
    %288 = vmatpush1.msra.mxu0 0.0
    %289 = vmatprep.subr.mxu0 0.0
    %290 = vmatpush1.msra.mxu0 0.0
    %291 = vmatprep.subr.mxu0 0.0
    %292 = vmatpush1.msra.mxu0 0.0
    %293 = vmatprep.subr.mxu0 0.0
    %294 = vmatpush1.msra.mxu0 0.0
    %295 = vmatprep.subr.mxu0 0.0
    %296 = vmatpush1.msra.mxu0 0.0
    %297 = vmatprep.subr.mxu0 0.0
    %298 = vmatpush1.msra.mxu0 0.0
    %299 = vmatprep.subr.mxu0 0.0
    %300 = vmatpush1.msra.mxu0 0.0
    %301 = vmatprep.subr.mxu0 0.0
    %302 = vmatpush1.msra.mxu0 0.0
    %303 = vmatprep.subr.mxu0 0.0
    %304 = vmatpush1.msra.mxu0 0.0
    %305 = vmatprep.subr.mxu0 0.0
    %306 = vmatpush1.msra.mxu0 0.0
    %307 = vmatprep.subr.mxu0 0.0
    %308 = vmatpush1.msra.mxu0 0.0
    %309 = vmatprep.subr.mxu0 0.0
    %310 = vmatpush1.msra.mxu0 0.0
    %311 = vmatprep.subr.mxu0 0.0
    %312 = vmatpush1.msra.mxu0 0.0
    %313 = vmatprep.subr.mxu0 0.0
    %314 = vmatpush1.msra.mxu0 0.0
    %315 = vmatprep.subr.mxu0 0.0
    %316 = vmatpush1.msra.mxu0 0.0
    %317 = vmatprep.mubr.f32.mxu0 0.0
    %318 = vmatmul.mubr.f32.gmra.mrb[0].mxu0 %v235
    %v319 = vpop.f32.mrb[0].mxu0
    %v320 = vadd.f32 0.0, %v319
    %v321 = vpop.f32.mrb[0].mxu0
    %322 = vmatprep.mubr.f32.mxu0 0.0
    %323 = vmatmul.mubr.f32.gmra.mrb[0].mxu0 %v236
    %v324 = vpop.f32.mrb[0].mxu0
    %v325 = vadd.f32 0.0, %v324
    %v326 = vpop.f32.mrb[0].mxu0
    %327 = vdwg.mxu0
    %v328 = vld [vmem:[#allocation7 + $0x290] sm:$0xff]
    %v329 = vld [vmem:[#allocation7 + $0x298] sm:$0xff]
    %330 = vmatprep.subr.mxu0 0.0
    %331 = vmatpush1.msra.mxu0 %v320
    %332 = vmatprep.subr.mxu0 0.0
    %333 = vmatpush1.msra.mxu0 %v325
    %334 = vmatprep.subr.mxu0 0.0
    %335 = vmatpush1.msra.mxu0 0.0
    %336 = vmatprep.subr.mxu0 0.0
    %337 = vmatpush1.msra.mxu0 0.0
    %338 = vmatprep.subr.mxu0 0.0
    %339 = vmatpush1.msra.mxu0 0.0
    %340 = vmatprep.subr.mxu0 0.0
    %341 = vmatpush1.msra.mxu0 0.0
    %342 = vmatprep.subr.mxu0 0.0
    %343 = vmatpush1.msra.mxu0 0.0
    %344 = vmatprep.subr.mxu0 0.0
    %345 = vmatpush1.msra.mxu0 0.0
    %346 = vmatprep.subr.mxu0 0.0
    %347 = vmatpush1.msra.mxu0 0.0
    %348 = vmatprep.subr.mxu0 0.0
    %349 = vmatpush1.msra.mxu0 0.0
    %350 = vmatprep.subr.mxu0 0.0
    %351 = vmatpush1.msra.mxu0 0.0
    %352 = vmatprep.subr.mxu0 0.0
    %353 = vmatpush1.msra.mxu0 0.0
    %354 = vmatprep.subr.mxu0 0.0
    %355 = vmatpush1.msra.mxu0 0.0
    %356 = vmatprep.subr.mxu0 0.0
    %357 = vmatpush1.msra.mxu0 0.0
    %358 = vmatprep.subr.mxu0 0.0
    %359 = vmatpush1.msra.mxu0 0.0
    %360 = vmatprep.subr.mxu0 0.0
    %361 = vmatpush1.msra.mxu0 0.0
    %362 = vmatprep.subr.mxu0 0.0
    %363 = vmatpush1.msra.mxu0 0.0
    %364 = vmatprep.subr.mxu0 0.0
    %365 = vmatpush1.msra.mxu0 0.0
    %366 = vmatprep.subr.mxu0 0.0
    %367 = vmatpush1.msra.mxu0 0.0
    %368 = vmatprep.subr.mxu0 0.0
    %369 = vmatpush1.msra.mxu0 0.0
    %370 = vmatprep.subr.mxu0 0.0
    %371 = vmatpush1.msra.mxu0 0.0
    %372 = vmatprep.subr.mxu0 0.0
    %373 = vmatpush1.msra.mxu0 0.0
    %374 = vmatprep.subr.mxu0 0.0
    %375 = vmatpush1.msra.mxu0 0.0
    %376 = vmatprep.subr.mxu0 0.0
    %377 = vmatpush1.msra.mxu0 0.0
    %378 = vmatprep.subr.mxu0 0.0
    %379 = vmatpush1.msra.mxu0 0.0
    %380 = vmatprep.subr.mxu0 0.0
    %381 = vmatpush1.msra.mxu0 0.0
    %382 = vmatprep.subr.mxu0 0.0
    %383 = vmatpush1.msra.mxu0 0.0
    %384 = vmatprep.subr.mxu0 0.0
    %385 = vmatpush1.msra.mxu0 0.0
    %386 = vmatprep.subr.mxu0 0.0
    %387 = vmatpush1.msra.mxu0 0.0
    %388 = vmatprep.subr.mxu0 0.0
    %389 = vmatpush1.msra.mxu0 0.0
    %390 = vmatprep.subr.mxu0 0.0
    %391 = vmatpush1.msra.mxu0 0.0
    %392 = vmatprep.subr.mxu0 0.0
    %393 = vmatpush1.msra.mxu0 0.0
    %394 = vmatprep.mubr.f32.mxu0 0.0
    %395 = vmatmul.mubr.f32.gmra.mrb[0].mxu0 %v155
    %v396 = vpop.f32.mrb[0].mxu0
    %v397 = vadd.f32 %v328, %v396
    %v398 = vpop.f32.mrb[0].mxu0
    %399 = vmatprep.mubr.f32.mxu0 0.0
    %400 = vmatmul.mubr.f32.gmra.mrb[0].mxu0 %v158
    %v401 = vpop.f32.mrb[0].mxu0
    %v402 = vadd.f32 %v329, %v401
    %v403 = vpop.f32.mrb[0].mxu0
    %404 = vdwg.mxu0
    %v405 = vmax.f32 %v397, 0.0
    %v406 = vmax.f32 %v402, 0.0
    %v407 = vld [vmem:[#allocation7 + $0x100] sm:$0xff]
    %v408 = vld [vmem:[#allocation7 + $0x108] sm:$0xff]
    %v409 = vld [vmem:[#allocation7 + $0x110] sm:$0xff]
    %v410 = vld [vmem:[#allocation7 + $0x118] sm:$0xff]
    %v411 = vld [vmem:[#allocation7 + $0x120] sm:$0xff]
    %v412 = vld [vmem:[#allocation7 + $0x128] sm:$0xff]
    %v413 = vld [vmem:[#allocation7 + $0x130] sm:$0xff]
    %v414 = vld [vmem:[#allocation7 + $0x138] sm:$0xff]
    %v415 = vld [vmem:[#allocation7 + $0x140] sm:$0xff]
    %v416 = vld [vmem:[#allocation7 + $0x148] sm:$0xff]
    %v417 = vld [vmem:[#allocation7 + $0x150] sm:$0xff]
    %v418 = vld [vmem:[#allocation7 + $0x158] sm:$0xff]
    %v419 = vld [vmem:[#allocation7 + $0x160] sm:$0xff]
    %v420 = vld [vmem:[#allocation7 + $0x168] sm:$0xff]
    %v421 = vld [vmem:[#allocation7 + $0x170] sm:$0xff]
    %v422 = vld [vmem:[#allocation7 + $0x178] sm:$0xff]
    %423 = vmatprep.subr.mxu0 0.0
    %424 = vmatpush1.msra.mxu0 %v407
    %425 = vmatprep.subr.mxu0 0.0
    %426 = vmatpush1.msra.mxu0 %v408
    %427 = vmatprep.subr.mxu0 0.0
    %428 = vmatpush1.msra.mxu0 %v409
    %429 = vmatprep.subr.mxu0 0.0
    %430 = vmatpush1.msra.mxu0 %v410
    %431 = vmatprep.subr.mxu0 0.0
    %432 = vmatpush1.msra.mxu0 %v411
    %433 = vmatprep.subr.mxu0 0.0
    %434 = vmatpush1.msra.mxu0 %v412
    %435 = vmatprep.subr.mxu0 0.0
    %436 = vmatpush1.msra.mxu0 %v413
    %437 = vmatprep.subr.mxu0 0.0
    %438 = vmatpush1.msra.mxu0 %v414
    %439 = vmatprep.subr.mxu0 0.0
    %440 = vmatpush1.msra.mxu0 %v415
    %441 = vmatprep.subr.mxu0 0.0
    %442 = vmatpush1.msra.mxu0 %v416
    %443 = vmatprep.subr.mxu0 0.0
    %444 = vmatpush1.msra.mxu0 %v417
    %445 = vmatprep.subr.mxu0 0.0
    %446 = vmatpush1.msra.mxu0 %v418
    %447 = vmatprep.subr.mxu0 0.0
    %448 = vmatpush1.msra.mxu0 %v419
    %449 = vmatprep.subr.mxu0 0.0
    %450 = vmatpush1.msra.mxu0 %v420
    %451 = vmatprep.subr.mxu0 0.0
    %452 = vmatpush1.msra.mxu0 %v421
    %453 = vmatprep.subr.mxu0 0.0
    %454 = vmatpush1.msra.mxu0 %v422
    %455 = vmatprep.subr.mxu0 0.0
    %456 = vmatpush1.msra.mxu0 0.0
    %457 = vmatprep.subr.mxu0 0.0
    %458 = vmatpush1.msra.mxu0 0.0
    %459 = vmatprep.subr.mxu0 0.0
    %460 = vmatpush1.msra.mxu0 0.0
    %461 = vmatprep.subr.mxu0 0.0
    %462 = vmatpush1.msra.mxu0 0.0
    %463 = vmatprep.subr.mxu0 0.0
    %464 = vmatpush1.msra.mxu0 0.0
    %465 = vmatprep.subr.mxu0 0.0
    %466 = vmatpush1.msra.mxu0 0.0
    %467 = vmatprep.subr.mxu0 0.0
    %468 = vmatpush1.msra.mxu0 0.0
    %469 = vmatprep.subr.mxu0 0.0
    %470 = vmatpush1.msra.mxu0 0.0
    %471 = vmatprep.subr.mxu0 0.0
    %472 = vmatpush1.msra.mxu0 0.0
    %473 = vmatprep.subr.mxu0 0.0
    %474 = vmatpush1.msra.mxu0 0.0
    %475 = vmatprep.subr.mxu0 0.0
    %476 = vmatpush1.msra.mxu0 0.0
    %477 = vmatprep.subr.mxu0 0.0
    %478 = vmatpush1.msra.mxu0 0.0
    %479 = vmatprep.subr.mxu0 0.0
    %480 = vmatpush1.msra.mxu0 0.0
    %481 = vmatprep.subr.mxu0 0.0
    %482 = vmatpush1.msra.mxu0 0.0
    %483 = vmatprep.subr.mxu0 0.0
    %484 = vmatpush1.msra.mxu0 0.0
    %485 = vmatprep.subr.mxu0 0.0
    %486 = vmatpush1.msra.mxu0 0.0
    %487 = vmatprep.mubr.f32.mxu0 0.0
    %488 = vmatmul.mubr.f32.gmra.mrb[0].mxu0 %v405
    %v489 = vpop.f32.mrb[0].mxu0
    %v490 = vadd.f32 0.0, %v489
    %v491 = vpop.f32.mrb[0].mxu0
    %492 = vmatprep.mubr.f32.mxu0 0.0
    %493 = vmatmul.mubr.f32.gmra.mrb[0].mxu0 %v406
    %v494 = vpop.f32.mrb[0].mxu0
    %v495 = vadd.f32 0.0, %v494
    %v496 = vpop.f32.mrb[0].mxu0
    %497 = vdwg.mxu0
    %v498 = vld [vmem:[#allocation7 + $0x2a0] sm:$0xff]
    %v499 = vld [vmem:[#allocation7 + $0x2a8] sm:$0xff]
    %500 = vmatprep.subr.mxu0 0.0
    %501 = vmatpush1.msra.mxu0 %v490
    %502 = vmatprep.subr.mxu0 0.0
    %503 = vmatpush1.msra.mxu0 %v495
    %504 = vmatprep.subr.mxu0 0.0
    %505 = vmatpush1.msra.mxu0 0.0
    %506 = vmatprep.subr.mxu0 0.0
    %507 = vmatpush1.msra.mxu0 0.0
    %508 = vmatprep.subr.mxu0 0.0
    %509 = vmatpush1.msra.mxu0 0.0
    %510 = vmatprep.subr.mxu0 0.0
    %511 = vmatpush1.msra.mxu0 0.0
    %512 = vmatprep.subr.mxu0 0.0
    %513 = vmatpush1.msra.mxu0 0.0
    %514 = vmatprep.subr.mxu0 0.0
    %515 = vmatpush1.msra.mxu0 0.0
    %516 = vmatprep.subr.mxu0 0.0
    %517 = vmatpush1.msra.mxu0 0.0
    %518 = vmatprep.subr.mxu0 0.0
    %519 = vmatpush1.msra.mxu0 0.0
    %520 = vmatprep.subr.mxu0 0.0
    %521 = vmatpush1.msra.mxu0 0.0
    %522 = vmatprep.subr.mxu0 0.0
    %523 = vmatpush1.msra.mxu0 0.0
    %524 = vmatprep.subr.mxu0 0.0
    %525 = vmatpush1.msra.mxu0 0.0
    %526 = vmatprep.subr.mxu0 0.0
    %527 = vmatpush1.msra.mxu0 0.0
    %528 = vmatprep.subr.mxu0 0.0
    %529 = vmatpush1.msra.mxu0 0.0
    %530 = vmatprep.subr.mxu0 0.0
    %531 = vmatpush1.msra.mxu0 0.0
    %532 = vmatprep.subr.mxu0 0.0
    %533 = vmatpush1.msra.mxu0 0.0
    %534 = vmatprep.subr.mxu0 0.0
    %535 = vmatpush1.msra.mxu0 0.0
    %536 = vmatprep.subr.mxu0 0.0
    %537 = vmatpush1.msra.mxu0 0.0
    %538 = vmatprep.subr.mxu0 0.0
    %539 = vmatpush1.msra.mxu0 0.0
    %540 = vmatprep.subr.mxu0 0.0
    %541 = vmatpush1.msra.mxu0 0.0
    %542 = vmatprep.subr.mxu0 0.0
    %543 = vmatpush1.msra.mxu0 0.0
    %544 = vmatprep.subr.mxu0 0.0
    %545 = vmatpush1.msra.mxu0 0.0
    %546 = vmatprep.subr.mxu0 0.0
    %547 = vmatpush1.msra.mxu0 0.0
    %548 = vmatprep.subr.mxu0 0.0
    %549 = vmatpush1.msra.mxu0 0.0
    %550 = vmatprep.subr.mxu0 0.0
    %551 = vmatpush1.msra.mxu0 0.0
    %552 = vmatprep.subr.mxu0 0.0
    %553 = vmatpush1.msra.mxu0 0.0
    %554 = vmatprep.subr.mxu0 0.0
    %555 = vmatpush1.msra.mxu0 0.0
    %556 = vmatprep.subr.mxu0 0.0
    %557 = vmatpush1.msra.mxu0 0.0
    %558 = vmatprep.subr.mxu0 0.0
    %559 = vmatpush1.msra.mxu0 0.0
    %560 = vmatprep.subr.mxu0 0.0
    %561 = vmatpush1.msra.mxu0 0.0
    %562 = vmatprep.subr.mxu0 0.0
    %563 = vmatpush1.msra.mxu0 0.0
    %564 = vmatprep.mubr.f32.mxu0 0.0
    %565 = vmatmul.mubr.f32.gmra.mrb[0].mxu0 %v155
    %v566 = vpop.f32.mrb[0].mxu0
    %v567 = vadd.f32 %v498, %v566
    %v568 = vpop.f32.mrb[0].mxu0
    %569 = vmatprep.mubr.f32.mxu0 0.0
    %570 = vmatmul.mubr.f32.gmra.mrb[0].mxu0 %v158
    %v571 = vpop.f32.mrb[0].mxu0
    %v572 = vadd.f32 %v499, %v571
    %v573 = vpop.f32.mrb[0].mxu0
    %574 = vdwg.mxu0
    %v575 = vrot.slane %v567, 4
    %v576 = vmax.f32 %v567, %v575
    %v577 = vrot.slane %v576, 2
    %v578 = vmax.f32 %v576, %v577
    %v579 = vrot.slane %v578, 1
    %v580 = vmax.f32 %v578, %v579
    %v581 = vrot.slane %v572, 4
    %v582 = vmax.f32 %v572, %v581
    %v583 = vrot.slane %v582, 2
    %v584 = vmax.f32 %v582, %v583
    %v585 = vrot.slane %v584, 1
    %v586 = vmax.f32 %v584, %v585
    %vm587 = vcmask 1040384
    %v588 = vsel %vm587, %v580, %v586
    %vm589 = vcmask 1041408
    %v590 = vsel %vm589, %v588, 0.0
    %v591 = vld [vmem:[#allocation7 + $0x180] sm:$0xff]
    %v592 = vld [vmem:[#allocation7 + $0x188] sm:$0xff]
    %v593 = vld [vmem:[#allocation7 + $0x190] sm:$0xff]
    %v594 = vld [vmem:[#allocation7 + $0x198] sm:$0xff]
    %v595 = vld [vmem:[#allocation7 + $0x1a0] sm:$0xff]
    %v596 = vld [vmem:[#allocation7 + $0x1a8] sm:$0xff]
    %v597 = vld [vmem:[#allocation7 + $0x1b0] sm:$0xff]
    %v598 = vld [vmem:[#allocation7 + $0x1b8] sm:$0xff]
    %v599 = vld [vmem:[#allocation7 + $0x1c0] sm:$0xff]
    %v600 = vld [vmem:[#allocation7 + $0x1c8] sm:$0xff]
    %v601 = vld [vmem:[#allocation7 + $0x1d0] sm:$0xff]
    %v602 = vld [vmem:[#allocation7 + $0x1d8] sm:$0xff]
    %v603 = vld [vmem:[#allocation7 + $0x1e0] sm:$0xff]
    %v604 = vld [vmem:[#allocation7 + $0x1e8] sm:$0xff]
    %v605 = vld [vmem:[#allocation7 + $0x1f0] sm:$0xff]
    %v606 = vld [vmem:[#allocation7 + $0x1f8] sm:$0xff]
    %v607 = vld [vmem:[#allocation7 + $0x2b0] sm:$0xff]
    %608 = vmatprep.subr.mxu0 0.0
    %609 = vmatpush1.msra.mxu0 %v591
    %610 = vmatprep.subr.mxu0 0.0
    %611 = vmatpush1.msra.mxu0 %v592
    %612 = vmatprep.subr.mxu0 0.0
    %613 = vmatpush1.msra.mxu0 %v593
    %614 = vmatprep.subr.mxu0 0.0
    %615 = vmatpush1.msra.mxu0 %v594
    %616 = vmatprep.subr.mxu0 0.0
    %617 = vmatpush1.msra.mxu0 %v595
    %618 = vmatprep.subr.mxu0 0.0
    %619 = vmatpush1.msra.mxu0 %v596
    %620 = vmatprep.subr.mxu0 0.0
    %621 = vmatpush1.msra.mxu0 %v597
    %622 = vmatprep.subr.mxu0 0.0
    %623 = vmatpush1.msra.mxu0 %v598
    %624 = vmatprep.subr.mxu0 0.0
    %625 = vmatpush1.msra.mxu0 %v599
    %626 = vmatprep.subr.mxu0 0.0
    %627 = vmatpush1.msra.mxu0 %v600
    %628 = vmatprep.subr.mxu0 0.0
    %629 = vmatpush1.msra.mxu0 %v601
    %630 = vmatprep.subr.mxu0 0.0
    %631 = vmatpush1.msra.mxu0 %v602
    %632 = vmatprep.subr.mxu0 0.0
    %633 = vmatpush1.msra.mxu0 %v603
    %634 = vmatprep.subr.mxu0 0.0
    %635 = vmatpush1.msra.mxu0 %v604
    %636 = vmatprep.subr.mxu0 0.0
    %637 = vmatpush1.msra.mxu0 %v605
    %638 = vmatprep.subr.mxu0 0.0
    %639 = vmatpush1.msra.mxu0 %v606
    %640 = vmatprep.subr.mxu0 0.0
    %641 = vmatpush1.msra.mxu0 0.0
    %642 = vmatprep.subr.mxu0 0.0
    %643 = vmatpush1.msra.mxu0 0.0
    %644 = vmatprep.subr.mxu0 0.0
    %645 = vmatpush1.msra.mxu0 0.0
    %646 = vmatprep.subr.mxu0 0.0
    %647 = vmatpush1.msra.mxu0 0.0
    %648 = vmatprep.subr.mxu0 0.0
    %649 = vmatpush1.msra.mxu0 0.0
    %650 = vmatprep.subr.mxu0 0.0
    %651 = vmatpush1.msra.mxu0 0.0
    %652 = vmatprep.subr.mxu0 0.0
    %653 = vmatpush1.msra.mxu0 0.0
    %654 = vmatprep.subr.mxu0 0.0
    %655 = vmatpush1.msra.mxu0 0.0
    %656 = vmatprep.subr.mxu0 0.0
    %657 = vmatpush1.msra.mxu0 0.0
    %658 = vmatprep.subr.mxu0 0.0
    %659 = vmatpush1.msra.mxu0 0.0
    %660 = vmatprep.subr.mxu0 0.0
    %661 = vmatpush1.msra.mxu0 0.0
    %662 = vmatprep.subr.mxu0 0.0
    %663 = vmatpush1.msra.mxu0 0.0
    %664 = vmatprep.subr.mxu0 0.0
    %665 = vmatpush1.msra.mxu0 0.0
    %666 = vmatprep.subr.mxu0 0.0
    %667 = vmatpush1.msra.mxu0 0.0
    %668 = vmatprep.subr.mxu0 0.0
    %669 = vmatpush1.msra.mxu0 0.0
    %670 = vmatprep.subr.mxu0 0.0
    %671 = vmatpush1.msra.mxu0 0.0
    %672 = vmatprep.mubr.f32.mxu0 0.0
    %673 = vmatmul.mubr.f32.gmra.mrb[0].mxu0 %v590
    %v674 = vpop.f32.mrb[0].mxu0
    %v675 = vadd.f32 %v607, %v674
    %v676 = vpop.f32.mrb[0].mxu0
    %677 = vdwg.mxu0
    %v678 = vmax.f32 %v675, 0.0
    %v679 = vld [vmem:[#allocation7 + $0x200] sm:$0xff]
    %v680 = vld [vmem:[#allocation7 + $0x208] sm:$0xff]
    %v681 = vld [vmem:[#allocation7 + $0x210] sm:$0xff]
    %v682 = vld [vmem:[#allocation7 + $0x218] sm:$0xff]
    %v683 = vld [vmem:[#allocation7 + $0x220] sm:$0xff]
    %v684 = vld [vmem:[#allocation7 + $0x228] sm:$0xff]
    %v685 = vld [vmem:[#allocation7 + $0x230] sm:$0xff]
    %v686 = vld [vmem:[#allocation7 + $0x238] sm:$0xff]
    %v687 = vld [vmem:[#allocation7 + $0x240] sm:$0xff]
    %v688 = vld [vmem:[#allocation7 + $0x248] sm:$0xff]
    %v689 = vld [vmem:[#allocation7 + $0x250] sm:$0xff]
    %v690 = vld [vmem:[#allocation7 + $0x258] sm:$0xff]
    %v691 = vld [vmem:[#allocation7 + $0x260] sm:$0xff]
    %v692 = vld [vmem:[#allocation7 + $0x268] sm:$0xff]
    %v693 = vld [vmem:[#allocation7 + $0x270] sm:$0xff]
    %v694 = vld [vmem:[#allocation7 + $0x278] sm:$0xff]
    %v695 = vld [vmem:[#allocation7 + $0x2b8] sm:$0xff]
    %696 = vmatprep.subr.mxu0 0.0
    %697 = vmatpush1.msra.mxu0 %v679
    %698 = vmatprep.subr.mxu0 0.0
    %699 = vmatpush1.msra.mxu0 %v680
    %700 = vmatprep.subr.mxu0 0.0
    %701 = vmatpush1.msra.mxu0 %v681
    %702 = vmatprep.subr.mxu0 0.0
    %703 = vmatpush1.msra.mxu0 %v682
    %704 = vmatprep.subr.mxu0 0.0
    %705 = vmatpush1.msra.mxu0 %v683
    %706 = vmatprep.subr.mxu0 0.0
    %707 = vmatpush1.msra.mxu0 %v684
    %708 = vmatprep.subr.mxu0 0.0
    %709 = vmatpush1.msra.mxu0 %v685
    %710 = vmatprep.subr.mxu0 0.0
    %711 = vmatpush1.msra.mxu0 %v686
    %712 = vmatprep.subr.mxu0 0.0
    %713 = vmatpush1.msra.mxu0 %v687
    %714 = vmatprep.subr.mxu0 0.0
    %715 = vmatpush1.msra.mxu0 %v688
    %716 = vmatprep.subr.mxu0 0.0
    %717 = vmatpush1.msra.mxu0 %v689
    %718 = vmatprep.subr.mxu0 0.0
    %719 = vmatpush1.msra.mxu0 %v690
    %720 = vmatprep.subr.mxu0 0.0
    %721 = vmatpush1.msra.mxu0 %v691
    %722 = vmatprep.subr.mxu0 0.0
    %723 = vmatpush1.msra.mxu0 %v692
    %724 = vmatprep.subr.mxu0 0.0
    %725 = vmatpush1.msra.mxu0 %v693
    %726 = vmatprep.subr.mxu0 0.0
    %727 = vmatpush1.msra.mxu0 %v694
    %728 = vmatprep.subr.mxu0 0.0
    %729 = vmatpush1.msra.mxu0 0.0
    %730 = vmatprep.subr.mxu0 0.0
    %731 = vmatpush1.msra.mxu0 0.0
    %732 = vmatprep.subr.mxu0 0.0
    %733 = vmatpush1.msra.mxu0 0.0
    %734 = vmatprep.subr.mxu0 0.0
    %735 = vmatpush1.msra.mxu0 0.0
    %736 = vmatprep.subr.mxu0 0.0
    %737 = vmatpush1.msra.mxu0 0.0
    %738 = vmatprep.subr.mxu0 0.0
    %739 = vmatpush1.msra.mxu0 0.0
    %740 = vmatprep.subr.mxu0 0.0
    %741 = vmatpush1.msra.mxu0 0.0
    %742 = vmatprep.subr.mxu0 0.0
    %743 = vmatpush1.msra.mxu0 0.0
    %744 = vmatprep.subr.mxu0 0.0
    %745 = vmatpush1.msra.mxu0 0.0
    %746 = vmatprep.subr.mxu0 0.0
    %747 = vmatpush1.msra.mxu0 0.0
    %748 = vmatprep.subr.mxu0 0.0
    %749 = vmatpush1.msra.mxu0 0.0
    %750 = vmatprep.subr.mxu0 0.0
    %751 = vmatpush1.msra.mxu0 0.0
    %752 = vmatprep.subr.mxu0 0.0
    %753 = vmatpush1.msra.mxu0 0.0
    %754 = vmatprep.subr.mxu0 0.0
    %755 = vmatpush1.msra.mxu0 0.0
    %756 = vmatprep.subr.mxu0 0.0
    %757 = vmatpush1.msra.mxu0 0.0
    %758 = vmatprep.subr.mxu0 0.0
    %759 = vmatpush1.msra.mxu0 0.0
    %760 = vmatprep.mubr.f32.mxu0 0.0
    %761 = vmatmul.mubr.f32.gmra.mrb[0].mxu0 %v678
    %v762 = vpop.f32.mrb[0].mxu0
    %v763 = vadd.f32 %v695, %v762
    %v764 = vpop.f32.mrb[0].mxu0
    %765 = vdwg.mxu0
    %766 = vst [vmem:[#allocation8] sm:$0xff] %v763
    // Predicated region
    $region26: #{tpu_custom_call.1} parent=1 // pred_check
      _
    $region27: #{tpu_custom_call.1} parent=1 // pred_check_branch
      %768 = sbr.rel (0) target = $region29
    $region28: #{tpu_custom_call.1} parent=1 // pred_region
      %s770 = ssub.s32 128, 128
      %771 = vsyncadd [#allocation4], %s770
      %s773 = sshll.u32 [#allocation8], 4
      %s774 = int_to_ptr.vmem [resolvable:$true] %s773
      %776 = dma.vmem_to_hbm [thread:$0]  %s774, 128, %s3, [#allocation4]
    $region29: #{tpu_custom_call.1} parent=1 // pred_fallthru
      _
    // Predicated region
    $region30: #{tpu_custom_call.1} parent=1 // pred_check
      _
    $region31: #{tpu_custom_call.1} parent=1 // pred_check_branch
      %778 = sbr.rel (0) target = $region33
    $region32: #{tpu_custom_call.1} parent=1 // pred_region
      %779 = dma.done [#allocation4], 128
    $region33: #{tpu_custom_call.1} parent=1 // pred_fallthru
      _
    %780 = vsyncpa [#allocation3], 1
    %781 = vsyncpa [#allocation6], 1
    %782 = vsyncpa [#allocation4], 1

</llo_original>
